<compile_context>
chip_gen: v7x
topology: tpu7x:2x2x1
jax: 0.10.0
libtpu: 0.0.40
codegen_flags: <defaults>
</compile_context>

<pallas_src>
import functools
import math

import jax
import jax.numpy as jnp
from jax import lax
from jax.experimental import pallas as pl
from jax.experimental.pallas import tpu as pltpu


_VMEM_SPEC = pl.BlockSpec(memory_space=pltpu.MemorySpace.VMEM)


@functools.lru_cache(maxsize=None)
def _vmem_budget_bytes():
    """Generation-aware VMEM budget: ~75% of physical VMEM (leaves headroom for
    Mosaic internal scratch + double-buffered in/out blocks).
    v7x (64 MiB) -> 48 MiB, v5e/v6e (128 MiB) -> 96 MiB.  Conservative 48 MiB
    fallback if the hardware query is unavailable."""
    cap = 64 * 1024 * 1024
    try:
        info = pltpu.get_tpu_info()
        c = int(getattr(info, "vmem_capacity_bytes", 0) or 0)
        if c > 0:
            cap = c
    except Exception:
        pass
    return (cap * 3) // 4


def _mosaic_params(f32_elems, dims=None):
    """CompilerParams with a VMEM limit sized to the working set (x2 headroom),
    clamped to the per-generation budget."""
    vmem = int(min(max(f32_elems * 4 * 2, 16 * 1024 * 1024), _vmem_budget_bytes()))
    kwargs = dict(vmem_limit_bytes=vmem)
    if dims is not None:
        kwargs["dimension_semantics"] = dims
    return pltpu.CompilerParams(**kwargs)


def _row_block(n, row_f32_elems):
    """Rows per grid tile, derived from the VMEM budget (not a flat 256): the
    per-block working set is ~ row_f32_elems * TM * 4 B plus double-buffered
    blocks, kept under ~half the budget.  Multiple of 8 sublanes."""
    budget = _vmem_budget_bytes() // 2
    per_row_bytes = max(1, row_f32_elems) * 4
    tm = int(budget // per_row_bytes)
    tm = max(8, min(tm, 512))
    tm -= tm % 8
    return n if n <= tm else tm


# ---------------------------------------------------------------------------
# Kernel 1: pairwise squared Euclidean distances  D_ij = ||x_i - x_j||^2
#           (row-tiled parallel grid; row norms precomputed once in the wrapper)
# ---------------------------------------------------------------------------
def _pdist_kernel(xr_ref, xf_ref, sqr_ref, sqf_ref, d_ref):
    xr = xr_ref[...].astype(jnp.float32)                      # (TM, D) row block
    xf = xf_ref[...].astype(jnp.float32)                      # (N, D)  full
    # Contract axis 1 of both operands: feeds the MXU without an XLU transpose.
    # TODO(synk): cast operands to bf16 (keep preferred_element_type=f32) once D
    # is large enough for MXU K-depth to matter; at D=32 it is negligible.
    g = lax.dot_general(xr, xf, (((1,), (1,)), ((), ())),
                        preferred_element_type=jnp.float32)   # (TM, N)
    d = sqr_ref[...] + sqf_ref[...] - 2.0 * g                 # (TM,1)+(1,N) bcast
    d_ref[...] = jnp.maximum(d, 0.0)


def pairwise_sq_dist(x):
    n, d = x.shape
    x = x.astype(jnp.float32)
    # Row norms once (O(N*D) wrapper glue) instead of recomputing the full-X
    # norms and transposing them in every grid step.
    sq = jnp.sum(x * x, axis=1)
    sq_col = sq.reshape(n, 1)
    sq_row = sq.reshape(1, n)
    tm = _row_block(n, d + 3 * n)
    return pl.pallas_call(
        _pdist_kernel,
        out_shape=jax.ShapeDtypeStruct((n, n), jnp.float32),
        grid=(pl.cdiv(n, tm),),
        in_specs=[
            pl.BlockSpec((tm, d), lambda i: (i, 0)),          # X row tile
            pl.BlockSpec((n, d), lambda i: (0, 0)),           # X full
            pl.BlockSpec((tm, 1), lambda i: (i, 0)),          # ||x_i||^2 row tile
            pl.BlockSpec((1, n), lambda i: (0, 0)),           # ||x_j||^2 lane-dense
        ],
        out_specs=pl.BlockSpec((tm, n), lambda i: (i, 0)),
        compiler_params=_mosaic_params(tm * d + n * d + 3 * tm * n + 2 * n,
                                       dims=("parallel",)),
    )(x, x, sq_col, sq_row)


# ---------------------------------------------------------------------------
# Kernel 2: per-row binary search for the precision (beta) hitting the target
#           perplexity, producing the conditional probability matrix P_{j|i}.
#           Row-parallel grid; diagonal mask hoisted out of the search loop.
# ---------------------------------------------------------------------------
def _perp_kernel(d_ref, p_ref, *, log_perp, n_search):
    dist = d_ref[...].astype(jnp.float32)                     # (TM, N) row block
    tm, n = dist.shape
    row0 = pl.program_id(0) * tm
    ri = lax.broadcasted_iota(jnp.int32, (tm, n), 0) + row0
    ci = lax.broadcasted_iota(jnp.int32, (tm, n), 1)
    # Diagonal pushed to +1e30 ONCE (not per search step).  Why 1e30 and not
    # jnp.inf: (a) exp(-1e30*beta) underflows to exactly 0 for every beta the
    # search can reach (beta >= 2^-50); (b) 1e30 * 0 = 0 in the entropy dot
    # product below, whereas inf * 0 would be NaN.  f32 only.
    dist_m = dist + jnp.where(ri == ci, 1e30, 0.0)

    big = 1e30

    def exp_rows(beta):
        expd = jnp.exp(-dist_m * beta)                        # exactly 0 on diagonal
        sump = jnp.maximum(jnp.sum(expd, axis=1, keepdims=True), 1e-12)
        return expd, sump

    beta0 = jnp.ones((tm, 1), jnp.float32)
    bmin0 = jnp.full((tm, 1), -big, jnp.float32)
    bmax0 = jnp.full((tm, 1), big, jnp.float32)
    expd0, sump0 = exp_rows(beta0)

    # TODO(synk): switch to a lax.while_loop that exits once max_row|H-logU|<1e-5
    # (typical convergence 15-25 steps); kept as a fixed fori_loop here because
    # while_loop with large vector carries is the least battle-tested Mosaic
    # path and this kernel is not the dominant cost of the forward.
    def body(_, carry):
        beta, bmin, bmax, expd, sump = carry
        inv_sump = pl.reciprocal(sump, approx=True)           # EUP, not a VPU divide
        h = jnp.log(sump) + beta * jnp.sum(dist_m * expd, axis=1,
                                           keepdims=True) * inv_sump
        too_high = (h - log_perp) > 0.0
        bmin_n = jnp.where(too_high, beta, bmin)
        bmax_n = jnp.where(too_high, bmax, beta)
        beta_up = jnp.where(bmax >= big, beta * 2.0, (beta + bmax) * 0.5)
        beta_dn = jnp.where(bmin <= -big, beta * 0.5, (beta + bmin) * 0.5)
        beta_n = jnp.where(too_high, beta_up, beta_dn)
        expd_n, sump_n = exp_rows(beta_n)
        return beta_n, bmin_n, bmax_n, expd_n, sump_n

    carry = lax.fori_loop(0, n_search, body, (beta0, bmin0, bmax0, expd0, sump0))
    _, _, _, expd, sump = carry
    # expd/sump already correspond to the final beta.  Final row normalization
    # kept EXACT (runs once); approx reciprocals stay inside the search loop only.
    p_ref[...] = expd / sump


def conditional_probs(dist, perplexity, n_search=50):
    n = dist.shape[0]
    tm = _row_block(n, 6 * n)
    kernel = functools.partial(
        _perp_kernel, log_perp=float(math.log(perplexity)), n_search=int(n_search)
    )
    return pl.pallas_call(
        kernel,
        out_shape=jax.ShapeDtypeStruct((n, n), jnp.float32),
        grid=(pl.cdiv(n, tm),),
        in_specs=[pl.BlockSpec((tm, n), lambda i: (i, 0))],
        out_specs=pl.BlockSpec((tm, n), lambda i: (i, 0)),
        compiler_params=_mosaic_params(6 * tm * n, dims=("parallel",)),
    )(dist)


# ---------------------------------------------------------------------------
# Kernel 3: t-SNE gradient-descent loop (early exaggeration + momentum) with a
#           fused joint-P prologue and min-max normalization epilogue.
#           Embedding kept lane-dense as (n_component, N); all per-iteration
#           math on VPU/EUP (no K=2 MXU matmuls, no full-matrix divides, no
#           off-diagonal mask, no per-iteration exaggeration multiply).
# ---------------------------------------------------------------------------
def _tsne_loop_kernel(ps_ref, y0_ref, y_ref, p_scr,
                      *, n_exag, n_plain, lr, exaggeration):
    n = ps_ref.shape[0]
    k_comp = y0_ref.shape[0]

    # ---- fused prologue: normalize + clamp the (already symmetrized) joint P
    # and pre-scale it by the early-exaggeration factor into one VMEM scratch.
    pj = ps_ref[...].astype(jnp.float32)                      # (N, N) symmetric
    srow = jnp.sum(pj, axis=1, keepdims=True)                 # (N, 1)
    stot = jnp.maximum(jnp.sum(srow, axis=0, keepdims=True), 1e-12)   # (1, 1)
    pj = jnp.maximum(pj / stot, 1e-12)                        # exact divide, once
    p_scr[...] = pj * exaggeration

    # Value the UNMASKED Student-t numerator takes on the diagonal (dist there
    # is exactly 0), so Z can be corrected without an (N, N) off-diagonal mask.
    diag_corr = float(n) * pl.reciprocal(jnp.ones((1, 1), jnp.float32), approx=True)

    yrs0 = tuple(y0_ref[k:k + 1, :].astype(jnp.float32) for k in range(k_comp))
    vs0 = tuple(jnp.zeros((1, n), jnp.float32) for _ in range(k_comp))

    def make_step(momentum):
        def step(_, carry):
            yrs, vs = carry                                   # tuples of (1, N)
            # Small (1,N)->(N,1) transposes; carrying both copies was rejected
            # because producing the column-layout gradient adds N^2 VALU work
            # (the binding slot) for an O(N)-latency saving.
            ycs = tuple(yr.T for yr in yrs)                   # (N, 1) columns
            sq_r = sum(yr * yr for yr in yrs)                 # (1, N)
            sq_c = sum(yc * yc for yc in ycs)                 # (N, 1)
            cross = sum(yc * yr for yc, yr in zip(ycs, yrs))  # (N, N) broadcast
            dist = jnp.maximum(sq_c + sq_r - 2.0 * cross, 0.0)
            # Unmasked Student-t numerator: the diagonal of pq cancels exactly
            # in the gradient (pq_jj * (y_j - y_j) == 0); only Z is corrected.
            num = pl.reciprocal(1.0 + dist, approx=True)      # EUP
            zrow = jnp.sum(num, axis=1, keepdims=True)        # (N, 1)
            z = jnp.maximum(jnp.sum(zrow, axis=0, keepdims=True) - diag_corr, 1e-12)
            inv_z = pl.reciprocal(z, approx=True)
            # Fused: (p - q) * num with q = num * inv_z (no Q temporary);
            # exaggeration is baked into p_scr per phase, not multiplied here.
            pq = num * (p_scr[...] - num * inv_z)             # (N, N), symmetric
            # pq symmetric => column sums == row sums -> sublane reductions give
            # lane-dense (1, N) results directly (no transposes, no MXU).
            rs = jnp.sum(pq, axis=0, keepdims=True)           # (1, N)
            atts = tuple(jnp.sum(yc * pq, axis=0, keepdims=True) for yc in ycs)
            grads = tuple(4.0 * (rs * yr - a) for yr, a in zip(yrs, atts))
            vs_n = tuple(momentum * v - lr * g for v, g in zip(vs, grads))
            yrs_n = tuple(yr + v for yr, v in zip(yrs, vs_n))
            return yrs_n, vs_n
        return step

    # Phase split (also hoists the momentum select): sklearn runs early
    # exaggeration AND momentum 0.5 for the first 250 iterations, then
    # momentum 0.8 without exaggeration.
    carry = (yrs0, vs0)
    if n_exag > 0:
        carry = lax.fori_loop(0, n_exag, make_step(0.5), carry)
    if n_plain > 0:
        p_scr[...] = p_scr[...] * (1.0 / exaggeration)        # un-exaggerate ONCE
        carry = lax.fori_loop(0, n_plain, make_step(0.8), carry)
    yrs_f, _ = carry

    # ---- fused epilogue: per-component min-max normalization (was kernel 4).
    for k in range(k_comp):
        yk = yrs_f[k]
        ymin = jnp.min(yk, axis=1, keepdims=True)
        ymax = jnp.max(yk, axis=1, keepdims=True)
        y_ref[k:k + 1, :] = (yk - ymin) / jnp.maximum(ymax - ymin, 1e-12)


def tsne_optimize(p_sym, y_init, n_iter, exag_iters=250, lr=200.0,
                  exaggeration=12.0):
    # TODO(synk): for large N (esp. v7x 64 MiB VMEM / 2 TCs) restructure with the
    # iteration loop in the wrapper and a row-tiled "parallel" grid streaming P
    # from HBM each step (roughly free at v7x's 3.2 TB/s, a loss on v5e) with the
    # z/rs reductions combined across row tiles; kept resident here, which is
    # the right trade on 128-MiB v5e/v6e parts.
    n = p_sym.shape[0]
    k = y_init.shape[0]
    n_exag = int(min(int(n_iter), int(exag_iters)))
    n_plain = int(max(0, int(n_iter) - int(exag_iters)))
    kernel = functools.partial(
        _tsne_loop_kernel, n_exag=n_exag, n_plain=n_plain,
        lr=float(lr), exaggeration=float(exaggeration),
    )
    return pl.pallas_call(
        kernel,
        out_shape=jax.ShapeDtypeStruct((k, n), jnp.float32),
        in_specs=[_VMEM_SPEC, _VMEM_SPEC],
        out_specs=_VMEM_SPEC,
        scratch_shapes=[pltpu.VMEM((n, n), jnp.float32)],
        compiler_params=_mosaic_params(8 * n * n + 8 * k * n),
    )(p_sym, y_init)


# ---------------------------------------------------------------------------
# TSNE module (JAX / Pallas version of the PyTorch nn.Module)
# ---------------------------------------------------------------------------
class TSNE:
    def __init__(self, args=None, n_component=2, perplexity=50, n_iter=10000,
                 init="random", random_state=0, verbose=0):
        self.args = args
        self.n_component = n_component
        self.perplexity = perplexity
        self.n_iter = n_iter
        self.init = init
        self.random_state = random_state
        self.verbose = verbose

    def forward(self, X, spker_names=None, spker_langs=None, spker_genders=None):
        X = jnp.asarray(X, jnp.float32)
        n = X.shape[0]

        # sklearn requires perplexity < n_samples; clamp for tiny synthetic N.
        perp = float(max(1.0, min(self.perplexity, (n - 1) / 3.0)))
        # Keep the iteration count tractable for the demo (module default 10000).
        n_iter = int(min(self.n_iter, 1000))

        # 1. high-dim pairwise squared distances  (Pallas, MXU, row-tiled)
        dist = pairwise_sq_dist(X)

        # 2. conditional probabilities via perplexity binary search (Pallas)
        p_cond = conditional_probs(dist, perp)

        # 3. symmetrize (tiny XLA glue); normalization/clamp/exaggeration and the
        #    min-max epilogue are fused into the optimizer kernel.
        # TODO(synk): fold the `+ p_cond.T` into the kernel prologue too once the
        # in-kernel (N,N) transpose is validated for arbitrary/small N.
        p_sym = p_cond + p_cond.T

        # random init (init='random', random_state=0): N(0, 1e-4), deterministic.
        # Lane-dense (n_component, N) layout for the optimizer.
        y0 = 1e-4 * jax.random.normal(
            jax.random.PRNGKey(self.random_state), (self.n_component, n),
            jnp.float32)

        # 4. gradient-descent loop + fused min-max normalization (Pallas)
        x_norm = tsne_optimize(p_sym, y0, n_iter)             # (K, N) in [0, 1]

        # TODO(synk): matplotlib scatter/text rendering and fig.savefig (plus
        # exact sklearn.manifold.TSNE internals e.g. Barnes-Hut) have no Pallas
        # equivalent; the numeric embedding X_norm is returned instead.
        return x_norm.T                                       # (N, K)

    __call__ = forward


if __name__ == "__main__":
    key = jax.random.PRNGKey(0)
    k_x, k_l, k_g = jax.random.split(key, 3)

    N, D = 8, 32  # 8 speakers, 32-dim speaker embeddings
    X = jax.random.normal(k_x, (N, D), jnp.float32)
    spker_names = [f"spk{i}" for i in range(N)]
    spker_langs = jax.random.randint(k_l, (N,), 0, 2)
    spker_genders = jax.random.randint(k_g, (N,), 0, 2)

    model = TSNE(args=None, n_component=2, perplexity=50, n_iter=10000,
                 init="random", random_state=0, verbose=0)
    X_norm = model(X, spker_names, spker_langs, spker_genders)
    X_norm = jax.block_until_ready(X_norm)

    assert X_norm.shape == (N, 2)
    assert bool(jnp.all(jnp.isfinite(X_norm)))
    assert bool(jnp.all(X_norm >= -1e-4)) and bool(jnp.all(X_norm <= 1.0 + 1e-4))
    print("KERNEL_OK")
</pallas_src>

<mosaic_0001>
module attributes {stable_mosaic.version = 11 : i64} {
  func.func @_pdist_kernel(%arg0: i32, %arg1: memref<8x32xf32, #tpu.memory_space<vmem>>, %arg2: memref<8x32xf32, #tpu.memory_space<vmem>>, %arg3: memref<8x1xf32, #tpu.memory_space<vmem>>, %arg4: memref<1x8xf32, #tpu.memory_space<vmem>>, %arg5: memref<8x8xf32, #tpu.memory_space<vmem>>) attributes {dimension_semantics = [#tpu.dimension_semantics<parallel>], iteration_bounds = array<i64: 1>, scalar_prefetch = 0 : i64, scratch_operands = 0 : i64, tpu.core_type = #tpu.core_type<tc>, window_params = [{transform_indices = @transform_0, window_bounds = array<i64: 8, 32>}, {pipeline_mode = #tpu.pipeline_mode<synchronous>, transform_indices = @transform_1, window_bounds = array<i64: 8, 32>}, {transform_indices = @transform_2, window_bounds = array<i64: 8, 1>}, {pipeline_mode = #tpu.pipeline_mode<synchronous>, transform_indices = @transform_3, window_bounds = array<i64: 1, 8>}, {transform_indices = @transform_4, window_bounds = array<i64: 8, 8>}]} {
    %c0 = arith.constant 0 : index
    %c0_0 = arith.constant 0 : index
    %0 = vector.load %arg1[%c0, %c0_0] : memref<8x32xf32, #tpu.memory_space<vmem>>, vector<8x32xf32>
    %c0_1 = arith.constant 0 : index
    %c0_2 = arith.constant 0 : index
    %1 = vector.load %arg2[%c0_1, %c0_2] : memref<8x32xf32, #tpu.memory_space<vmem>>, vector<8x32xf32>
    %cst = arith.constant dense<0.000000e+00> : vector<8x8xf32>
    %2 = tpu.matmul %0, %1, %cst {dimension_numbers = #tpu.dot_dimension_numbers<[1], [1], [0], [0], [0, 0, 1, 0], [], []>} : vector<8x32xf32>, vector<8x32xf32>, vector<8x8xf32> -> vector<8x8xf32>
    %c0_3 = arith.constant 0 : index
    %c0_4 = arith.constant 0 : index
    %3 = vector.load %arg3[%c0_3, %c0_4] : memref<8x1xf32, #tpu.memory_space<vmem>>, vector<8x1xf32>
    %c0_5 = arith.constant 0 : index
    %c0_6 = arith.constant 0 : index
    %4 = vector.load %arg4[%c0_5, %c0_6] : memref<1x8xf32, #tpu.memory_space<vmem>>, vector<1x8xf32>
    %5 = vector.broadcast %3 : vector<8x1xf32> to vector<8x8xf32>
    %6 = vector.broadcast %4 : vector<1x8xf32> to vector<8x8xf32>
    %7 = arith.addf %5, %6 : vector<8x8xf32>
    %cst_7 = arith.constant 2.000000e+00 : f32
    %8 = vector.broadcast %cst_7 : f32 to vector<8x8xf32>
    %9 = arith.mulf %8, %2 : vector<8x8xf32>
    %10 = arith.subf %7, %9 : vector<8x8xf32>
    %cst_8 = arith.constant 0.000000e+00 : f32
    %11 = vector.broadcast %cst_8 : f32 to vector<8x8xf32>
    %12 = arith.maximumf %10, %11 : vector<8x8xf32>
    %c0_9 = arith.constant 0 : index
    %c0_10 = arith.constant 0 : index
    %13 = vector.load %arg5[%c0_9, %c0_10] : memref<8x8xf32, #tpu.memory_space<vmem>>, vector<8x8xf32>
    tpu.vector_store %arg5[%c0_9, %c0_10], %12 {strides = array<i32>} : memref<8x8xf32, #tpu.memory_space<vmem>>, vector<8x8xf32>,
    return
  }
  func.func @transform_0(%arg0: i32) -> (i32, i32) {
    %c0_i32 = arith.constant 0 : i32
    %c0_i32_0 = arith.constant 0 : i32
    return %arg0, %c0_i32 : i32, i32
  }
  func.func @transform_1(%arg0: i32) -> (i32, i32) {
    %c0_i32 = arith.constant 0 : i32
    %c0_i32_0 = arith.constant 0 : i32
    %c0_i32_1 = arith.constant 0 : i32
    return %c0_i32, %c0_i32_0 : i32, i32
  }
  func.func @transform_2(%arg0: i32) -> (i32, i32) {
    %c0_i32 = arith.constant 0 : i32
    %c0_i32_0 = arith.constant 0 : i32
    return %arg0, %c0_i32 : i32, i32
  }
  func.func @transform_3(%arg0: i32) -> (i32, i32) {
    %c0_i32 = arith.constant 0 : i32
    %c0_i32_0 = arith.constant 0 : i32
    %c0_i32_1 = arith.constant 0 : i32
    return %c0_i32, %c0_i32_0 : i32, i32
  }
  func.func @transform_4(%arg0: i32) -> (i32, i32) {
    %c0_i32 = arith.constant 0 : i32
    %c0_i32_0 = arith.constant 0 : i32
    return %arg0, %c0_i32 : i32, i32
  }
}

</mosaic_0001>

<llo_original>
// kernel: tpu_custom_call.1
$region0: #{tpu_custom_call.1}
  #allocation0 [shape = 'u32[]', space=smem, size = 0x4, offset = 0x4, fixed_abs, tag = 'smem constant byte address 0x4 - core index']
  #allocation1 [shape = 'u32[144,128]{1,0:T(1,128)}', space=vmem, size = 0x12000, scoped, tag = 'internal scratch']
  %s0 = inlined_call_operand.vmem [shape: f32[8,32], index: 0, kind: input, shape index: {}]
  %s1 = inlined_call_operand.hbm [shape: f32[8,32], index: 1, kind: input, shape index: {}]
  %s2 = inlined_call_operand.vmem [shape: f32[8,1], index: 2, kind: input, shape index: {}]
  %s3 = inlined_call_operand.vmem [shape: f32[1,8], index: 3, kind: input, shape index: {}]
  %s4 = inlined_call_operand.hbm [shape: f32[8,8], index: 4, kind: output, shape index: {}]
  %s5 = sld [smem:[#allocation0]]
  $region30: #{tpu_custom_call.1} parent=0
    _
  %s7 = ssub.s32 1, %s5
  %s8 = scalar_select 0, %s7, %s5
  $region1: #{tpu_custom_call.1} parent=0
    #allocation2 [shape = 'u8[4096]{0}', space=vmem, size = 0x1000, scoped, tag = 'input window, operand 1, single buffered']
    #allocation3 [shape = 's32[1]{0}', space=sflag, size = 0x4, scoped, tag = 'scoped memory for tpu_custom_call.1']
    #allocation4 [shape = 's32[1]{0}', space=sflag, size = 0x4, scoped, tag = 'scoped memory for tpu_custom_call.1']
    #allocation5 [shape = 'u8[4096]{0}', space=vmem, size = 0x1000, scoped, tag = 'output window, operand 0, single buffered']
    %9 = vsyncpa [#allocation3], 0
    %10 = vsyncpa [#allocation4], 0
    // Predicated region
    $region2: #{tpu_custom_call.1} parent=1 // pred_check
      _
    $region3: #{tpu_custom_call.1} parent=1 // pred_check_branch
      %12 = sbr.rel (0) target = $region5
    $region4: #{tpu_custom_call.1} parent=1 // pred_region
      _
    $region5: #{tpu_custom_call.1} parent=1 // pred_fallthru
      _
    // Predicated region
    $region6: #{tpu_custom_call.1} parent=1 // pred_check
      _
    $region7: #{tpu_custom_call.1} parent=1 // pred_check_branch
      %14 = sbr.rel (0) target = $region9
    $region8: #{tpu_custom_call.1} parent=1 // pred_region
      %s16 = ssub.s32 128, 128
      %17 = vsyncadd [#allocation3], %s16
      %s19 = sshll.u32 [#allocation2], 4
      %s20 = int_to_ptr.vmem [resolvable:$true] %s19
      %22 = dma.hbm_to_vmem [thread:$0]  %s1, 128, %s20, [#allocation3]
    $region9: #{tpu_custom_call.1} parent=1 // pred_fallthru
      _
    // Predicated region
    $region10: #{tpu_custom_call.1} parent=1 // pred_check
      _
    $region11: #{tpu_custom_call.1} parent=1 // pred_check_branch
      %24 = sbr.rel (0) target = $region13
    $region12: #{tpu_custom_call.1} parent=1 // pred_region
      _
    $region13: #{tpu_custom_call.1} parent=1 // pred_fallthru
      _
    // Predicated region
    $region14: #{tpu_custom_call.1} parent=1 // pred_check
      _
    $region15: #{tpu_custom_call.1} parent=1 // pred_check_branch
      %26 = sbr.rel (0) target = $region17
    $region16: #{tpu_custom_call.1} parent=1 // pred_region
      _
    $region17: #{tpu_custom_call.1} parent=1 // pred_fallthru
      _
    // Predicated region
    $region18: #{tpu_custom_call.1} parent=1 // pred_check
      _
    $region19: #{tpu_custom_call.1} parent=1 // pred_check_branch
      %28 = sbr.rel (0) target = $region21
    $region20: #{tpu_custom_call.1} parent=1 // pred_region
      %29 = dma.done [#allocation3], 128
    $region21: #{tpu_custom_call.1} parent=1 // pred_fallthru
      _
    %v30 = vld [vmem:[%s0] sm:$0xff]
    %v31 = vld [vmem:[#allocation2] sm:$0xff]
    %vm32 = vcmask 261120
    %v34 = vsel %vm32, %v30, 0
    %v37 = vsel %vm32, %v31, 0
    %39 = vmatprep.subr.mxu0 0.0
    %40 = vmatpush1.xpose.msra.mxu0 %v37
    %41 = vmatprep.subr.mxu0 0.0
    %42 = vmatpush1.xpose.msra.mxu0 0.0
    %43 = vmatprep.subr.mxu0 0.0
    %44 = vmatpush1.xpose.msra.mxu0 0.0
    %45 = vmatprep.subr.mxu0 0.0
    %46 = vmatpush1.xpose.msra.mxu0 0.0
    %47 = vmatprep.subr.mxu0 0.0
    %48 = vmatpush1.xpose.msra.mxu0 0.0
    %49 = vmatprep.subr.mxu0 0.0
    %50 = vmatpush1.xpose.msra.mxu0 0.0
    %51 = vmatprep.subr.mxu0 0.0
    %52 = vmatpush1.xpose.msra.mxu0 0.0
    %53 = vmatprep.subr.mxu0 0.0
    %54 = vmatpush1.xpose.msra.mxu0 0.0
    %55 = vmatprep.subr.mxu0 0.0
    %56 = vmatpush1.xpose.msra.mxu0 0.0
    %57 = vmatprep.subr.mxu0 0.0
    %58 = vmatpush1.xpose.msra.mxu0 0.0
    %59 = vmatprep.subr.mxu0 0.0
    %60 = vmatpush1.xpose.msra.mxu0 0.0
    %61 = vmatprep.subr.mxu0 0.0
    %62 = vmatpush1.xpose.msra.mxu0 0.0
    %63 = vmatprep.subr.mxu0 0.0
    %64 = vmatpush1.xpose.msra.mxu0 0.0
    %65 = vmatprep.subr.mxu0 0.0
    %66 = vmatpush1.xpose.msra.mxu0 0.0
    %67 = vmatprep.subr.mxu0 0.0
    %68 = vmatpush1.xpose.msra.mxu0 0.0
    %69 = vmatprep.subr.mxu0 0.0
    %70 = vmatpush1.xpose.msra.mxu0 0.0
    %71 = vmatprep.subr.mxu0 0.0
    %72 = vmatpush1.xpose.msra.mxu0 0.0
    %73 = vmatprep.subr.mxu0 0.0
    %74 = vmatpush1.xpose.msra.mxu0 0.0
    %75 = vmatprep.subr.mxu0 0.0
    %76 = vmatpush1.xpose.msra.mxu0 0.0
    %77 = vmatprep.subr.mxu0 0.0
    %78 = vmatpush1.xpose.msra.mxu0 0.0
    %79 = vmatprep.subr.mxu0 0.0
    %80 = vmatpush1.xpose.msra.mxu0 0.0
    %81 = vmatprep.subr.mxu0 0.0
    %82 = vmatpush1.xpose.msra.mxu0 0.0
    %83 = vmatprep.subr.mxu0 0.0
    %84 = vmatpush1.xpose.msra.mxu0 0.0
    %85 = vmatprep.subr.mxu0 0.0
    %86 = vmatpush1.xpose.msra.mxu0 0.0
    %87 = vmatprep.subr.mxu0 0.0
    %88 = vmatpush1.xpose.msra.mxu0 0.0
    %89 = vmatprep.subr.mxu0 0.0
    %90 = vmatpush1.xpose.msra.mxu0 0.0
    %91 = vmatprep.subr.mxu0 0.0
    %92 = vmatpush1.xpose.msra.mxu0 0.0
    %93 = vmatprep.subr.mxu0 0.0
    %94 = vmatpush1.xpose.msra.mxu0 0.0
    %95 = vmatprep.subr.mxu0 0.0
    %96 = vmatpush1.xpose.msra.mxu0 0.0
    %97 = vmatprep.subr.mxu0 0.0
    %98 = vmatpush1.xpose.msra.mxu0 0.0
    %99 = vmatprep.subr.mxu0 0.0
    %100 = vmatpush1.xpose.msra.mxu0 0.0
    %101 = vmatprep.subr.mxu0 0.0
    %102 = vmatpush1.xpose.msra.mxu0 0.0
    %103 = vmatprep.mubr.f32.mxu0 0.0
    %104 = vmatmul.mubr.f32.gmra.mrb[0].mxu0 %v34
    %v105 = vpop.f32.mrb[0].mxu0
    %v106 = vadd.f32 0.0, %v105
    %v107 = vpop.f32.mrb[0].mxu0
    %108 = vdwg.mxu0
    %v109 = vld [vmem:[%s2] sm:$0xff]
    %v110 = vld [vmem:[%s3] sm:$0x1]
    %112 = vset.pattern.permute.xlu0 0
    %113 = vperm.xlu0 %112, %v109
    %v114 = vpop.permute.xlu0 %113
    %v117 = vlaneseq
    %v118 = vshrl.u32 %v117, 7
    %v119 = vsub.s32 0, %v118
    %v120 = vrot.slane %v110, %v119
    %v122 = vadd.f32 %v114, %v120
    %v123 = vmul.f32 %v106, 2.0
    %v124 = vsub.f32 %v122, %v123
    %v125 = vmax.f32 %v124, 0.0
    %vm126 = vcmask 64512
    %127 = vst.msk [vmem:[#allocation5] sm:$0xff] %vm126, %v125
    // Predicated region
    $region22: #{tpu_custom_call.1} parent=1 // pred_check
      _
    $region23: #{tpu_custom_call.1} parent=1 // pred_check_branch
      %129 = sbr.rel (0) target = $region25
    $region24: #{tpu_custom_call.1} parent=1 // pred_region
      %s131 = ssub.s32 128, 128
      %132 = vsyncadd [#allocation4], %s131
      %s134 = sshll.u32 [#allocation5], 4
      %s135 = int_to_ptr.vmem [resolvable:$true] %s134
      %137 = dma.vmem_to_hbm [thread:$0]  %s135, 128, %s4, [#allocation4]
    $region25: #{tpu_custom_call.1} parent=1 // pred_fallthru
      _
    // Predicated region
    $region26: #{tpu_custom_call.1} parent=1 // pred_check
      _
    $region27: #{tpu_custom_call.1} parent=1 // pred_check_branch
      %139 = sbr.rel (0) target = $region29
    $region28: #{tpu_custom_call.1} parent=1 // pred_region
      %140 = dma.done [#allocation4], 128
    $region29: #{tpu_custom_call.1} parent=1 // pred_fallthru
      _
    %141 = vsyncpa [#allocation3], 1
    %142 = vsyncpa [#allocation4], 1

</llo_original>
